<compile_context>
chip_gen: v5e
topology: v5e:2x2
jax: 0.10.0
libtpu: 0.0.40
codegen_flags: <defaults>
</compile_context>

<pallas_src>
import numpy as np
import jax
import jax.numpy as jnp
from jax.experimental import pallas as pl
from jax.experimental.pallas import tpu as pltpu


# ----------------------------------------------------------------------------
# Host-side setup: B-spline basis matrix (matches scipy.interpolate.BSpline
# with extrapolate=True, i.e. polynomial extension of the boundary pieces).
# ----------------------------------------------------------------------------
def bspline_basis_matrix(knots, deg):
    t = np.asarray(knots, dtype=np.float64)
    k = deg
    n = len(t) - k - 1  # number of basis functions

    def find_interval(x):
        # ell s.t. t[ell] <= x < t[ell+1], clamped to [k, n-1] (extrapolation)
        ell = k
        while ell < n - 1 and x >= t[ell + 1]:
            ell += 1
        return ell

    def deboor_nonzero(x, ell):
        # de Boor recursion: h[j] = B_{ell-k+j, k}(x) (polynomial extension OK)
        h = np.zeros(k + 1, dtype=np.float64)
        h[0] = 1.0
        for j in range(1, k + 1):
            hh = h[:j].copy()
            h[0] = 0.0
            for r in range(1, j + 1):
                xb = t[ell + r]
                xa = t[ell + r - j]
                if xb == xa:
                    h[r] = 0.0
                    continue
                w = hh[r - 1] / (xb - xa)
                h[r - 1] += w * (xb - x)
                h[r] = w * (x - xa)
        return h

    B = np.zeros((n, len(t)), dtype=np.float64)
    for m, x in enumerate(t):
        ell = find_interval(x)
        h = deboor_nonzero(x, ell)
        for j in range(k + 1):
            B[ell - k + j, m] = h[j]
    return B.astype(np.float32)  # (num_basis, len(t)) = (5, 9)


# ----------------------------------------------------------------------------
# Pallas kernel: one batch tile of  y = x @ (alpha @ B)
#   alpha_ref : (dim_out, num_basis)  resident (same block every step)
#   basis_ref : (num_basis, T)        resident (same block every step)
#   x_ref     : (tn, dim_out)         batch tile
#   o_ref     : (tn, T)               batch tile of the output
# ----------------------------------------------------------------------------
def _fmlp_kernel(alpha_ref, basis_ref, x_ref, o_ref):
    betas = jnp.dot(
        alpha_ref[...], basis_ref[...], preferred_element_type=jnp.float32
    )  # (dim_out, T) — tiny, recomputed per step (cheaper than a separate op)
    o_ref[...] = jnp.dot(
        x_ref[...], betas, preferred_element_type=jnp.float32
    ).astype(o_ref.dtype)


def functional_mlp_forward(x, alpha, basis, *, max_tile_n=4096):
    """x: (N, dim_out) f32, alpha: (dim_out, num_basis) f32,
    basis: (num_basis, T) f32  ->  y: (N, T) f32."""
    N, dim_out = x.shape
    num_basis, T = basis.shape
    assert alpha.shape == (dim_out, num_basis)
    assert max_tile_n % 8 == 0

    # Full extent when small (single block), otherwise sublane-aligned tiles.
    tn = N if N <= max_tile_n else max_tile_n
    grid_n = pl.cdiv(N, tn)

    cost = pl.CostEstimate(
        flops=2 * N * dim_out * T + 2 * grid_n * dim_out * num_basis * T,
        transcendentals=0,
        bytes_accessed=4 * (N * (dim_out + T) + dim_out * num_basis + num_basis * T),
    )

    return pl.pallas_call(
        _fmlp_kernel,
        out_shape=jax.ShapeDtypeStruct((N, T), jnp.float32),
        grid=(grid_n,),
        in_specs=[
            pl.BlockSpec((dim_out, num_basis), lambda i: (0, 0)),  # alpha (resident)
            pl.BlockSpec((num_basis, T), lambda i: (0, 0)),        # basis (resident)
            pl.BlockSpec((tn, dim_out), lambda i: (i, 0)),         # x batch tile
        ],
        out_specs=pl.BlockSpec((tn, T), lambda i: (i, 0)),         # y batch tile
        compiler_params=pltpu.CompilerParams(
            dimension_semantics=("parallel",)
        ),
        cost_estimate=cost,
    )(alpha, basis, x)


# ----------------------------------------------------------------------------
# Parameter setup mirroring Functional_MLP.__init__ (deterministic init).
# ----------------------------------------------------------------------------
def make_params(dim_out, t, key):
    deg = 3
    num_basis = len(t) - deg - 1
    B = jnp.asarray(bspline_basis_matrix(t, deg))  # (num_basis, T)
    k_alpha, _ = jax.random.split(key)
    # Xavier-uniform stand-in for torch.nn.init.xavier_uniform_
    limit = float(np.sqrt(6.0 / (dim_out + num_basis)))
    alpha = jax.random.uniform(k_alpha, (dim_out, num_basis),
                               minval=-limit, maxval=limit, dtype=jnp.float32)
    # NOTE: self.beta exists in the module but is unused in forward().
    return alpha, B


if __name__ == "__main__":
    key = jax.random.PRNGKey(0)
    t = [0.1, 0.2, 0.3, 0.4, 0.5, 0.6, 0.7, 0.8, 0.9]
    dim_out = 4

    k_x, k_x2, k_p = jax.random.split(key, 3)
    alpha, B = make_params(dim_out, t, k_p)

    # Small case matching the module's typical use (single full-extent block).
    batch = 2
    x = jax.random.normal(k_x, (batch, dim_out), dtype=jnp.float32)
    y = jax.block_until_ready(functional_mlp_forward(x, alpha, B))
    ref = x @ alpha @ B
    assert y.shape == (batch, len(t))
    np.testing.assert_allclose(np.asarray(y), np.asarray(ref),
                               rtol=1e-5, atol=1e-5)

    # Larger, non-multiple-of-8 batch as a single full-extent block.
    batch2 = 300
    x2 = jax.random.normal(k_x2, (batch2, dim_out), dtype=jnp.float32)
    y2 = jax.block_until_ready(functional_mlp_forward(x2, alpha, B))
    ref2 = x2 @ alpha @ B
    assert y2.shape == (batch2, len(t))
    np.testing.assert_allclose(np.asarray(y2), np.asarray(ref2),
                               rtol=1e-5, atol=1e-5)

    # Same batch forced through the tiled grid path (3 tiles, partial last
    # tile) to exercise pipelining + OOB masking.
    y3 = jax.block_until_ready(functional_mlp_forward(x2, alpha, B,
                                                      max_tile_n=128))
    np.testing.assert_allclose(np.asarray(y3), np.asarray(ref2),
                               rtol=1e-5, atol=1e-5)

    print("KERNEL_OK")
</pallas_src>

<mosaic_0001>
module attributes {stable_mosaic.version = 11 : i64} {
  func.func @_fmlp_kernel(%arg0: i32, %arg1: memref<4x5xf32, #tpu.memory_space<vmem>>, %arg2: memref<5x9xf32, #tpu.memory_space<vmem>>, %arg3: memref<2x4xf32, #tpu.memory_space<vmem>>, %arg4: memref<2x9xf32, #tpu.memory_space<vmem>>) attributes {dimension_semantics = [#tpu.dimension_semantics<parallel>], iteration_bounds = array<i64: 1>, scalar_prefetch = 0 : i64, scratch_operands = 0 : i64, tpu.core_type = #tpu.core_type<tc>, window_params = [{pipeline_mode = #tpu.pipeline_mode<synchronous>, transform_indices = @transform_0, window_bounds = array<i64: 4, 5>}, {pipeline_mode = #tpu.pipeline_mode<synchronous>, transform_indices = @transform_1, window_bounds = array<i64: 5, 9>}, {transform_indices = @transform_2, window_bounds = array<i64: 2, 4>}, {transform_indices = @transform_3, window_bounds = array<i64: 2, 9>}]} {
    %c0 = arith.constant 0 : index
    %c0_0 = arith.constant 0 : index
    %0 = vector.load %arg1[%c0, %c0_0] : memref<4x5xf32, #tpu.memory_space<vmem>>, vector<4x5xf32>
    %c0_1 = arith.constant 0 : index
    %c0_2 = arith.constant 0 : index
    %1 = vector.load %arg2[%c0_1, %c0_2] : memref<5x9xf32, #tpu.memory_space<vmem>>, vector<5x9xf32>
    %cst = arith.constant dense<0.000000e+00> : vector<4x9xf32>
    %2 = tpu.matmul %0, %1, %cst {dimension_numbers = #tpu.dot_dimension_numbers<[1], [0], [0], [1], [0, 0, 1, 1], [], []>} : vector<4x5xf32>, vector<5x9xf32>, vector<4x9xf32> -> vector<4x9xf32>
    %c0_3 = arith.constant 0 : index
    %c0_4 = arith.constant 0 : index
    %3 = vector.load %arg3[%c0_3, %c0_4] : memref<2x4xf32, #tpu.memory_space<vmem>>, vector<2x4xf32>
    %cst_5 = arith.constant dense<0.000000e+00> : vector<2x9xf32>
    %4 = tpu.matmul %3, %2, %cst_5 {dimension_numbers = #tpu.dot_dimension_numbers<[1], [0], [0], [1], [0, 0, 1, 1], [], []>} : vector<2x4xf32>, vector<4x9xf32>, vector<2x9xf32> -> vector<2x9xf32>
    %c0_6 = arith.constant 0 : index
    %c0_7 = arith.constant 0 : index
    %5 = vector.load %arg4[%c0_6, %c0_7] : memref<2x9xf32, #tpu.memory_space<vmem>>, vector<2x9xf32>
    tpu.vector_store %arg4[%c0_6, %c0_7], %4 {strides = array<i32>} : memref<2x9xf32, #tpu.memory_space<vmem>>, vector<2x9xf32>,
    return
  }
  func.func @transform_0(%arg0: i32) -> (i32, i32) {
    %c0_i32 = arith.constant 0 : i32
    %c0_i32_0 = arith.constant 0 : i32
    %c0_i32_1 = arith.constant 0 : i32
    return %c0_i32, %c0_i32_0 : i32, i32
  }
  func.func @transform_1(%arg0: i32) -> (i32, i32) {
    %c0_i32 = arith.constant 0 : i32
    %c0_i32_0 = arith.constant 0 : i32
    %c0_i32_1 = arith.constant 0 : i32
    return %c0_i32, %c0_i32_0 : i32, i32
  }
  func.func @transform_2(%arg0: i32) -> (i32, i32) {
    %c0_i32 = arith.constant 0 : i32
    %c0_i32_0 = arith.constant 0 : i32
    return %arg0, %c0_i32 : i32, i32
  }
  func.func @transform_3(%arg0: i32) -> (i32, i32) {
    %c0_i32 = arith.constant 0 : i32
    %c0_i32_0 = arith.constant 0 : i32
    return %arg0, %c0_i32 : i32, i32
  }
}

</mosaic_0001>

<llo_original>
// kernel: tpu_custom_call.1
$region0: #{tpu_custom_call.1}
  #allocation0 [shape = 'u32[]', space=smem, size = 0x4, offset = 0x4, fixed_abs, tag = 'smem constant byte address 0x4 - core index']
  #allocation1 [shape = 'u32[72,128]{1,0:T(1,128)}', space=vmem, size = 0x9000, scoped, tag = 'internal scratch']
  %s0 = inlined_call_operand.hbm [shape: f32[4,5], index: 0, kind: input, shape index: {}]
  %s1 = inlined_call_operand.hbm [shape: f32[5,9], index: 1, kind: input, shape index: {}]
  %s2 = inlined_call_operand.hbm [shape: f32[2,4], index: 2, kind: input, shape index: {}]
  %s3 = inlined_call_operand.hbm [shape: f32[2,9], index: 3, kind: output, shape index: {}]
  %s4 = sld [smem:[#allocation0]]
  $region34: #{tpu_custom_call.1} parent=0
    _
  %s6 = ssub.s32 1, %s4
  %s7 = scalar_select 0, %s6, %s4
  $region1: #{tpu_custom_call.1} parent=0
    #allocation2 [shape = 'u8[2048]{0}', space=vmem, size = 0x800, scoped, tag = 'input window, operand 0, single buffered']
    #allocation3 [shape = 's32[1]{0}', space=sflag, size = 0x4, scoped, tag = 'scoped memory for tpu_custom_call.1']
    #allocation4 [shape = 's32[1]{0}', space=sflag, size = 0x4, scoped, tag = 'scoped memory for tpu_custom_call.1']
    #allocation5 [shape = 'u8[4096]{0}', space=vmem, size = 0x1000, scoped, tag = 'input window, operand 1, single buffered']
    #allocation6 [shape = 's32[1]{0}', space=sflag, size = 0x4, scoped, tag = 'scoped memory for tpu_custom_call.1']
    #allocation7 [shape = 'u8[1024]{0}', space=vmem, size = 0x400, scoped, tag = 'input window, operand 2, single buffered']
    #allocation8 [shape = 'u8[1024]{0}', space=vmem, size = 0x400, scoped, tag = 'output window, operand 0, single buffered']
    %8 = vsyncpa [#allocation3], 0
    %9 = vsyncpa [#allocation6], 0
    %10 = vsyncpa [#allocation4], 0
    // Predicated region
    $region2: #{tpu_custom_call.1} parent=1 // pred_check
      _
    $region3: #{tpu_custom_call.1} parent=1 // pred_check_branch
      %12 = sbr.rel (0) target = $region5
    $region4: #{tpu_custom_call.1} parent=1 // pred_region
      %14 = vsyncadd [#allocation3], 0
      %s16 = sshll.u32 %s0, 4
      %s17 = int_to_ptr.hbm [resolvable:$true] %s16
      %s18 = sshll.u32 [#allocation2], 4
      %s19 = int_to_ptr.vmem [resolvable:$true] %s18
      %21 = dma.hbm_to_vmem [thread:$0]  %s17, 64, %s19, [#allocation3]
    $region5: #{tpu_custom_call.1} parent=1 // pred_fallthru
      _
    // Predicated region
    $region6: #{tpu_custom_call.1} parent=1 // pred_check
      _
    $region7: #{tpu_custom_call.1} parent=1 // pred_check_branch
      %23 = sbr.rel (0) target = $region9
    $region8: #{tpu_custom_call.1} parent=1 // pred_region
      %25 = vsyncadd [#allocation6], 0
      %s27 = sshll.u32 %s1, 4
      %s28 = int_to_ptr.hbm [resolvable:$true] %s27
      %s29 = sshll.u32 [#allocation5], 4
      %s30 = int_to_ptr.vmem [resolvable:$true] %s29
      %32 = dma.hbm_to_vmem [thread:$0]  %s28, 128, %s30, [#allocation6]
    $region9: #{tpu_custom_call.1} parent=1 // pred_fallthru
      _
    // Predicated region
    $region10: #{tpu_custom_call.1} parent=1 // pred_check
      _
    $region11: #{tpu_custom_call.1} parent=1 // pred_check_branch
      %34 = sbr.rel (0) target = $region13
    $region12: #{tpu_custom_call.1} parent=1 // pred_region
      %36 = vsyncadd [#allocation6], 0
      %s38 = sshll.u32 %s2, 4
      %s39 = int_to_ptr.hbm [resolvable:$true] %s38
      %s40 = sshll.u32 [#allocation7], 4
      %s41 = int_to_ptr.vmem [resolvable:$true] %s40
      %43 = dma.hbm_to_vmem [thread:$0]  %s39, 32, %s41, [#allocation6]
    $region13: #{tpu_custom_call.1} parent=1 // pred_fallthru
      _
    // Predicated region
    $region14: #{tpu_custom_call.1} parent=1 // pred_check
      _
    $region15: #{tpu_custom_call.1} parent=1 // pred_check_branch
      %45 = sbr.rel (0) target = $region17
    $region16: #{tpu_custom_call.1} parent=1 // pred_region
      %47 = dma.done [#allocation3], 64
    $region17: #{tpu_custom_call.1} parent=1 // pred_fallthru
      _
    // Predicated region
    $region18: #{tpu_custom_call.1} parent=1 // pred_check
      _
    $region19: #{tpu_custom_call.1} parent=1 // pred_check_branch
      %49 = sbr.rel (0) target = $region21
    $region20: #{tpu_custom_call.1} parent=1 // pred_region
      %51 = dma.done [#allocation6], 128
    $region21: #{tpu_custom_call.1} parent=1 // pred_fallthru
      _
    // Predicated region
    $region22: #{tpu_custom_call.1} parent=1 // pred_check
      _
    $region23: #{tpu_custom_call.1} parent=1 // pred_check_branch
      %53 = sbr.rel (0) target = $region25
    $region24: #{tpu_custom_call.1} parent=1 // pred_region
      %55 = dma.done [#allocation6], 32
    $region25: #{tpu_custom_call.1} parent=1 // pred_fallthru
      _
    %v56 = vld [vmem:[#allocation2] sm:$0xf]
    %v57 = vld [vmem:[#allocation5] sm:$0x1f]
    %vm58 = vcmask 39936
    %v60 = vsel %vm58, %v56, 0
    %vm62 = vcmask 1044480
    %v64 = vsel %vm62, %v57, 0
    %66 = vmatpush.msra.mxu0 0.0
    %67 = vmatpush.msra.mxu0 0.0
    %68 = vmatpush.msra.mxu0 0.0
    %69 = vmatpush.msra.mxu0 0.0
    %70 = vmatpush.msra.mxu0 0.0
    %71 = vmatpush.msra.mxu0 0.0
    %72 = vmatpush.msra.mxu0 0.0
    %73 = vmatpush.msra.mxu0 0.0
    %74 = vmatpush.msra.mxu0 0.0
    %75 = vmatpush.msra.mxu0 0.0
    %76 = vmatpush.msra.mxu0 0.0
    %77 = vmatpush.msra.mxu0 0.0
    %78 = vmatpush.msra.mxu0 0.0
    %79 = vmatpush.msra.mxu0 0.0
    %80 = vmatpush.msra.mxu0 0.0
    %81 = vmatpush.msra.mxu0 %v64
    %82 = vmatmul.f32.gmra.mxu0 %v60
    %v83 = vpop.f32.mrf.mxu0
    %v84 = vadd.f32 0.0, %v83
    %85 = vdwg.mxu0
    %v86 = vld [vmem:[#allocation7] sm:$0x3]
    %vm87 = vcmask 31744
    %v89 = vsel %vm87, %v86, 0
    %vm91 = vcmask 1043456
    %v93 = vsel %vm91, %v84, 0
    %95 = vmatpush.msra.mxu0 0.0
    %96 = vmatpush.msra.mxu0 0.0
    %97 = vmatpush.msra.mxu0 0.0
    %98 = vmatpush.msra.mxu0 0.0
    %99 = vmatpush.msra.mxu0 0.0
    %100 = vmatpush.msra.mxu0 0.0
    %101 = vmatpush.msra.mxu0 0.0
    %102 = vmatpush.msra.mxu0 0.0
    %103 = vmatpush.msra.mxu0 0.0
    %104 = vmatpush.msra.mxu0 0.0
    %105 = vmatpush.msra.mxu0 0.0
    %106 = vmatpush.msra.mxu0 0.0
    %107 = vmatpush.msra.mxu0 0.0
    %108 = vmatpush.msra.mxu0 0.0
    %109 = vmatpush.msra.mxu0 0.0
    %110 = vmatpush.msra.mxu0 %v93
    %111 = vmatmul.f32.gmra.mxu0 %v89
    %v112 = vpop.f32.mrf.mxu0
    %v113 = vadd.f32 0.0, %v112
    %114 = vdwg.mxu0
    %vm115 = vcmask 66560
    %116 = vst.msk [vmem:[#allocation8] sm:$0x3] %vm115, %v113
    // Predicated region
    $region26: #{tpu_custom_call.1} parent=1 // pred_check
      _
    $region27: #{tpu_custom_call.1} parent=1 // pred_check_branch
      %118 = sbr.rel (0) target = $region29
    $region28: #{tpu_custom_call.1} parent=1 // pred_region
      %120 = vsyncadd [#allocation4], 0
      %s122 = sshll.u32 [#allocation8], 4
      %s123 = int_to_ptr.vmem [resolvable:$true] %s122
      %s124 = sshll.u32 %s3, 4
      %s125 = int_to_ptr.hbm [resolvable:$true] %s124
      %127 = dma.vmem_to_hbm [thread:$0]  %s123, 32, %s125, [#allocation4]
    $region29: #{tpu_custom_call.1} parent=1 // pred_fallthru
      _
    // Predicated region
    $region30: #{tpu_custom_call.1} parent=1 // pred_check
      _
    $region31: #{tpu_custom_call.1} parent=1 // pred_check_branch
      %129 = sbr.rel (0) target = $region33
    $region32: #{tpu_custom_call.1} parent=1 // pred_region
      %131 = dma.done [#allocation4], 32
    $region33: #{tpu_custom_call.1} parent=1 // pred_fallthru
      _
    %132 = vsyncpa [#allocation3], 1
    %133 = vsyncpa [#allocation6], 1
    %134 = vsyncpa [#allocation4], 1

</llo_original>
